<compile_context>
chip_gen: v7x
topology: tpu7x:2x2x1
jax: 0.10.0
libtpu: 0.0.40
codegen_flags: <defaults>
</compile_context>

<pallas_src>
import functools

import jax
import jax.numpy as jnp
from jax.experimental import pallas as pl
from jax.experimental.pallas import tpu as pltpu


def _round_up(x, m):
    return ((x + m - 1) // m) * m


# ---------------------------------------------------------------------------
# Fast path: whole W1/W2 resident in VMEM, grid = (row_tiles,)
#   o_i = GELU(x_i @ W1 + b1) @ W2 + b2      (written straight to o_ref)
# ---------------------------------------------------------------------------
def _ffn_kernel_resident(x_ref, w1_ref, b1_ref, w2_ref, b2_ref, o_ref, *,
                         gelu_dtype):
    h = jnp.dot(x_ref[...], w1_ref[...], preferred_element_type=jnp.float32)
    h = h + b1_ref[...].astype(jnp.float32)
    if gelu_dtype is not None:          # optional bf16 GELU (v6e/v7x VPU/EUP relief)
        h = h.astype(gelu_dtype)
    # TODO(synk): PyTorch nn.GELU() defaults to the exact erf form; the tanh
    # approximation is used for guaranteed Mosaic lowering (max abs dev ~1e-3).
    h = jax.nn.gelu(h, approximate=True)
    out = jnp.dot(h.astype(w2_ref.dtype), w2_ref[...],
                  preferred_element_type=jnp.float32)
    o_ref[...] = (out + b2_ref[...].astype(jnp.float32)).astype(o_ref.dtype)


# ---------------------------------------------------------------------------
# Fallback: hidden axis tiled (contraction axis of the 2nd matmul),
# grid = (row_tiles, hidden_tiles); f32 VMEM scratch accumulates partials.
# ---------------------------------------------------------------------------
def _ffn_kernel_tiled(x_ref, w1_ref, b1_ref, w2_ref, b2_ref, o_ref, acc_ref, *,
                      gelu_dtype):
    j = pl.program_id(1)

    @pl.when(j == 0)
    def _init():
        acc_ref[...] = jnp.zeros_like(acc_ref)

    h = jnp.dot(x_ref[...], w1_ref[...], preferred_element_type=jnp.float32)
    h = h + b1_ref[...].astype(jnp.float32)
    if gelu_dtype is not None:
        h = h.astype(gelu_dtype)
    h = jax.nn.gelu(h, approximate=True)
    acc_ref[...] += jnp.dot(h.astype(w2_ref.dtype), w2_ref[...],
                            preferred_element_type=jnp.float32)

    @pl.when(j == pl.num_programs(1) - 1)
    def _finalize():
        o_ref[...] = (acc_ref[...] + b2_ref[...].astype(jnp.float32)
                      ).astype(o_ref.dtype)


# ---------------------------------------------------------------------------
# Wrapper: flattening, lane-dense (D, H) padding, row tiling, path selection.
# ---------------------------------------------------------------------------
def feedforward_pallas(x, w1, b1, w2, b2, *,
                       block_rows=512,
                       block_h=1024,
                       compute_dtype=jnp.bfloat16,
                       out_dtype=None,
                       gelu_dtype=None,
                       weights_resident=None,       # None = auto by VMEM budget
                       weight_buffering=None,       # e.g. 3 -> pl.Buffered(3) on W tiles
                       vmem_budget_bytes=48 * 1024 * 1024):
    orig_shape = x.shape
    D = orig_shape[-1]
    Dw1, H = w1.shape
    Hw2, Dout = w2.shape
    assert D == Dw1 and H == Hw2 and Dout == D, (x.shape, w1.shape, w2.shape)

    out_dtype = out_dtype or x.dtype
    x2d = x.reshape(-1, D)
    R = x2d.shape[0]

    # MXU operand dtype (bf16 default).  No-op casts if params already bf16.
    if compute_dtype is not None:
        x2d = x2d.astype(compute_dtype)
        w1 = w1.astype(compute_dtype)
        w2 = w2.astype(compute_dtype)

    in_bytes = x2d.dtype.itemsize
    w_bytes = w1.dtype.itemsize
    b_bytes = b1.dtype.itemsize
    out_bytes = jnp.dtype(out_dtype).itemsize

    # --- Pad feature / hidden dims to lane-dense multiples of 128 -----------
    D_pad = _round_up(D, 128)
    if D_pad != D:
        x2d = jnp.pad(x2d, ((0, 0), (0, D_pad - D)))
        w1 = jnp.pad(w1, ((0, D_pad - D), (0, 0)))
        w2 = jnp.pad(w2, ((0, 0), (0, D_pad - D)))
        b2 = jnp.pad(b2, (0, D_pad - D))
    H_pad = _round_up(H, 128)
    if H_pad != H:
        # zero-padded hidden units contribute exactly 0 to the output
        w1 = jnp.pad(w1, ((0, 0), (0, H_pad - H)))
        b1 = jnp.pad(b1, (0, H_pad - H))
        w2 = jnp.pad(w2, ((0, H_pad - H), (0, 0)))

    # --- Row tiling: >= 2 row tiles when possible (v7x: 2 TensorCores) ------
    block_rows = max(8, _round_up(block_rows, 8))
    if _round_up(R, 8) <= block_rows:
        block_rows = max(8, _round_up((R + 1) // 2, 8))
    R_pad = _round_up(R, block_rows)
    if R_pad != R:
        x2d = jnp.pad(x2d, ((0, R_pad - R), (0, 0)))
    num_row_tiles = R_pad // block_rows

    b1_2d = b1.reshape(1, -1)
    b2_2d = b2.reshape(1, -1)

    # --- Path choice: resident weights vs hidden-axis tiling ----------------
    def _resident_vmem_bytes():
        return (2 * block_rows * D_pad * in_bytes            # x tile (dbl-buffered)
                + 2 * 2 * D_pad * H_pad * w_bytes            # W1 + W2 buffers
                + 2 * (H_pad + D_pad) * b_bytes              # biases
                + 2 * block_rows * D_pad * out_bytes         # out tile
                + block_rows * H_pad * 4)                    # f32 hidden activations

    if weights_resident is None:
        weights_resident = _resident_vmem_bytes() <= vmem_budget_bytes

    if weights_resident:
        kernel = functools.partial(_ffn_kernel_resident, gelu_dtype=gelu_dtype)
        out2d = pl.pallas_call(
            kernel,
            out_shape=jax.ShapeDtypeStruct((R_pad, D_pad), out_dtype),
            grid=(num_row_tiles,),
            in_specs=[
                pl.BlockSpec((block_rows, D_pad), lambda i: (i, 0)),   # x tile
                pl.BlockSpec((D_pad, H_pad), lambda i: (0, 0)),        # W1 resident
                pl.BlockSpec((1, H_pad), lambda i: (0, 0)),            # b1 resident
                pl.BlockSpec((H_pad, D_pad), lambda i: (0, 0)),        # W2 resident
                pl.BlockSpec((1, D_pad), lambda i: (0, 0)),            # b2 resident
            ],
            out_specs=pl.BlockSpec((block_rows, D_pad), lambda i: (i, 0)),
            compiler_params=pltpu.CompilerParams(
                dimension_semantics=("parallel",),
                vmem_limit_bytes=vmem_budget_bytes),
        )(x2d, w1, b1_2d, w2, b2_2d)
    else:
        # Size the hidden tile so streamed weight tiles (+ buffers) fit VMEM.
        block_h_eff = min(_round_up(min(block_h, H_pad), 128), H_pad)
        n_buf = weight_buffering or 2

        def _tiled_vmem_bytes(bh):
            return (2 * block_rows * D_pad * in_bytes
                    + n_buf * 2 * D_pad * bh * w_bytes       # W1/W2 tiles
                    + n_buf * bh * b_bytes + 2 * D_pad * b_bytes
                    + 2 * block_rows * D_pad * out_bytes
                    + block_rows * D_pad * 4                 # f32 accumulator
                    + block_rows * bh * 4)                   # f32 hidden tile

        while block_h_eff > 128 and _tiled_vmem_bytes(block_h_eff) > vmem_budget_bytes:
            block_h_eff = _round_up(block_h_eff // 2, 128)

        H_grid = _round_up(H_pad, block_h_eff)
        if H_grid != H_pad:
            w1 = jnp.pad(w1, ((0, 0), (0, H_grid - H_pad)))
            b1_2d = jnp.pad(b1_2d, ((0, 0), (0, H_grid - H_pad)))
            w2 = jnp.pad(w2, ((0, H_grid - H_pad), (0, 0)))

        w_kwargs = {}
        if weight_buffering is not None:
            # Deeper pipelining on the per-step weight-tile DMAs (sweep 2 vs 3).
            w_kwargs = dict(pipeline_mode=pl.Buffered(weight_buffering))

        kernel = functools.partial(_ffn_kernel_tiled, gelu_dtype=gelu_dtype)
        out2d = pl.pallas_call(
            kernel,
            out_shape=jax.ShapeDtypeStruct((R_pad, D_pad), out_dtype),
            grid=(num_row_tiles, H_grid // block_h_eff),
            in_specs=[
                pl.BlockSpec((block_rows, D_pad), lambda i, j: (i, 0)),          # x
                pl.BlockSpec((D_pad, block_h_eff), lambda i, j: (0, j), **w_kwargs),  # W1 tile
                pl.BlockSpec((1, block_h_eff), lambda i, j: (0, j)),              # b1 tile
                pl.BlockSpec((block_h_eff, D_pad), lambda i, j: (j, 0), **w_kwargs),  # W2 tile
                pl.BlockSpec((1, D_pad), lambda i, j: (0, 0)),                    # b2
            ],
            out_specs=pl.BlockSpec((block_rows, D_pad), lambda i, j: (i, 0)),
            scratch_shapes=[pltpu.VMEM((block_rows, D_pad), jnp.float32)],
            compiler_params=pltpu.CompilerParams(
                dimension_semantics=("parallel", "arbitrary"),
                vmem_limit_bytes=vmem_budget_bytes),
        )(x2d, w1, b1_2d, w2, b2_2d)

    out2d = out2d[:R, :D]   # drop row / lane padding
    return out2d.reshape(*orig_shape[:-1], D)


if __name__ == "__main__":
    key = jax.random.PRNGKey(0)
    kx, k1, kb1, k2, kb2 = jax.random.split(key, 5)

    # Swin-like small stage: D=96 is NOT a multiple of 128 -> exercises the
    # lane-dense D padding; hidden = 4*D = 384.
    B, N, D, H = 2, 64, 96, 384
    x = jax.random.normal(kx, (B, N, D), dtype=jnp.float32)
    w1 = jax.random.normal(k1, (D, H), dtype=jnp.float32) * 0.05
    b1 = jax.random.normal(kb1, (H,), dtype=jnp.float32) * 0.05
    w2 = jax.random.normal(k2, (H, D), dtype=jnp.float32) * 0.05
    b2 = jax.random.normal(kb2, (D,), dtype=jnp.float32) * 0.05

    # Pure-JAX reference (same tanh-GELU formulation, highest matmul precision).
    hp = jax.lax.Precision.HIGHEST
    h_ref = jax.nn.gelu(
        jnp.einsum("bnd,dh->bnh", x, w1, precision=hp) + b1, approximate=True)
    ref = jnp.einsum("bnh,hd->bnd", h_ref, w2, precision=hp) + b2

    # 1) Default path: bf16 MXU operands, weights VMEM-resident, 1-D row grid
    #    (auto-split into >= 2 row tiles for the v7x megacore).
    out_bf16 = jax.block_until_ready(feedforward_pallas(x, w1, b1, w2, b2))
    assert out_bf16.shape == (B, N, D)
    assert jnp.allclose(out_bf16, ref, atol=5e-2, rtol=5e-2), \
        float(jnp.max(jnp.abs(out_bf16 - ref)))

    # 2) f32 operands + forced hidden-axis tiling (exercises the accumulator
    #    fallback path and the hidden-dim padding).
    out_f32 = jax.block_until_ready(
        feedforward_pallas(x, w1, b1, w2, b2, compute_dtype=jnp.float32,
                           weights_resident=False, block_rows=64, block_h=256))
    assert out_f32.shape == (B, N, D)
    assert jnp.allclose(out_f32, ref, atol=5e-3, rtol=5e-3), \
        float(jnp.max(jnp.abs(out_f32 - ref)))

    print("KERNEL_OK")
</pallas_src>

<mosaic_0001>
module attributes {stable_mosaic.version = 11 : i64} {
  func.func @_ffn_kernel_resident(%arg0: i32, %arg1: memref<64x128xbf16, #tpu.memory_space<vmem>>, %arg2: memref<128x384xbf16, #tpu.memory_space<vmem>>, %arg3: memref<1x384xf32, #tpu.memory_space<vmem>>, %arg4: memref<384x128xbf16, #tpu.memory_space<vmem>>, %arg5: memref<1x128xf32, #tpu.memory_space<vmem>>, %arg6: memref<64x128xf32, #tpu.memory_space<vmem>>) attributes {dimension_semantics = [#tpu.dimension_semantics<parallel>], iteration_bounds = array<i64: 2>, scalar_prefetch = 0 : i64, scratch_operands = 0 : i64, tpu.core_type = #tpu.core_type<tc>, window_params = [{transform_indices = @transform_0, window_bounds = array<i64: 64, 128>}, {pipeline_mode = #tpu.pipeline_mode<synchronous>, transform_indices = @transform_1, window_bounds = array<i64: 128, 384>}, {pipeline_mode = #tpu.pipeline_mode<synchronous>, transform_indices = @transform_2, window_bounds = array<i64: 1, 384>}, {pipeline_mode = #tpu.pipeline_mode<synchronous>, transform_indices = @transform_3, window_bounds = array<i64: 384, 128>}, {pipeline_mode = #tpu.pipeline_mode<synchronous>, transform_indices = @transform_4, window_bounds = array<i64: 1, 128>}, {transform_indices = @transform_5, window_bounds = array<i64: 64, 128>}]} {
    %c0 = arith.constant 0 : index
    %c0_0 = arith.constant 0 : index
    %0 = vector.load %arg1[%c0, %c0_0] : memref<64x128xbf16, #tpu.memory_space<vmem>>, vector<64x128xbf16>
    %c0_1 = arith.constant 0 : index
    %c0_2 = arith.constant 0 : index
    %1 = vector.load %arg2[%c0_1, %c0_2] : memref<128x384xbf16, #tpu.memory_space<vmem>>, vector<128x384xbf16>
    %cst = arith.constant dense<0.000000e+00> : vector<64x384xf32>
    %2 = tpu.matmul %0, %1, %cst {dimension_numbers = #tpu.dot_dimension_numbers<[1], [0], [0], [1], [0, 0, 1, 1], [], []>} : vector<64x128xbf16>, vector<128x384xbf16>, vector<64x384xf32> -> vector<64x384xf32>
    %c0_3 = arith.constant 0 : index
    %c0_4 = arith.constant 0 : index
    %3 = vector.load %arg3[%c0_3, %c0_4] : memref<1x384xf32, #tpu.memory_space<vmem>>, vector<1x384xf32>
    %4 = vector.broadcast %3 : vector<1x384xf32> to vector<64x384xf32>
    %5 = arith.addf %2, %4 : vector<64x384xf32>
    %6 = arith.mulf %5, %5 : vector<64x384xf32>
    %7 = arith.mulf %5, %6 : vector<64x384xf32>
    %cst_5 = arith.constant 4.471500e-02 : f32
    %8 = vector.broadcast %cst_5 : f32 to vector<64x384xf32>
    %9 = arith.mulf %8, %7 : vector<64x384xf32>
    %10 = arith.addf %5, %9 : vector<64x384xf32>
    %cst_6 = arith.constant 0.797884583 : f32
    %11 = vector.broadcast %cst_6 : f32 to vector<64x384xf32>
    %12 = arith.mulf %11, %10 : vector<64x384xf32>
    %13 = math.tanh %12 : vector<64x384xf32>
    %cst_7 = arith.constant 1.000000e+00 : f32
    %14 = vector.broadcast %cst_7 : f32 to vector<64x384xf32>
    %15 = arith.addf %14, %13 : vector<64x384xf32>
    %cst_8 = arith.constant 5.000000e-01 : f32
    %16 = vector.broadcast %cst_8 : f32 to vector<64x384xf32>
    %17 = arith.mulf %16, %15 : vector<64x384xf32>
    %18 = arith.mulf %5, %17 : vector<64x384xf32>
    %19 = arith.truncf %18 : vector<64x384xf32> to vector<64x384xbf16>
    %c0_9 = arith.constant 0 : index
    %c0_10 = arith.constant 0 : index
    %20 = vector.load %arg4[%c0_9, %c0_10] : memref<384x128xbf16, #tpu.memory_space<vmem>>, vector<384x128xbf16>
    %cst_11 = arith.constant dense<0.000000e+00> : vector<64x128xf32>
    %21 = tpu.matmul %19, %20, %cst_11 {dimension_numbers = #tpu.dot_dimension_numbers<[1], [0], [0], [1], [0, 0, 1, 1], [], []>} : vector<64x384xbf16>, vector<384x128xbf16>, vector<64x128xf32> -> vector<64x128xf32>
    %c0_12 = arith.constant 0 : index
    %c0_13 = arith.constant 0 : index
    %22 = vector.load %arg5[%c0_12, %c0_13] : memref<1x128xf32, #tpu.memory_space<vmem>>, vector<1x128xf32>
    %23 = vector.broadcast %22 : vector<1x128xf32> to vector<64x128xf32>
    %24 = arith.addf %21, %23 : vector<64x128xf32>
    %c0_14 = arith.constant 0 : index
    %c0_15 = arith.constant 0 : index
    %25 = vector.load %arg6[%c0_14, %c0_15] : memref<64x128xf32, #tpu.memory_space<vmem>>, vector<64x128xf32>
    tpu.vector_store %arg6[%c0_14, %c0_15], %24 {strides = array<i32>} : memref<64x128xf32, #tpu.memory_space<vmem>>, vector<64x128xf32>,
    return
  }
  func.func @transform_0(%arg0: i32) -> (i32, i32) {
    %c0_i32 = arith.constant 0 : i32
    %c0_i32_0 = arith.constant 0 : i32
    return %arg0, %c0_i32 : i32, i32
  }
  func.func @transform_1(%arg0: i32) -> (i32, i32) {
    %c0_i32 = arith.constant 0 : i32
    %c0_i32_0 = arith.constant 0 : i32
    %c0_i32_1 = arith.constant 0 : i32
    return %c0_i32, %c0_i32_0 : i32, i32
  }
  func.func @transform_2(%arg0: i32) -> (i32, i32) {
    %c0_i32 = arith.constant 0 : i32
    %c0_i32_0 = arith.constant 0 : i32
    %c0_i32_1 = arith.constant 0 : i32
    return %c0_i32, %c0_i32_0 : i32, i32
  }
  func.func @transform_3(%arg0: i32) -> (i32, i32) {
    %c0_i32 = arith.constant 0 : i32
    %c0_i32_0 = arith.constant 0 : i32
    %c0_i32_1 = arith.constant 0 : i32
    return %c0_i32, %c0_i32_0 : i32, i32
  }
  func.func @transform_4(%arg0: i32) -> (i32, i32) {
    %c0_i32 = arith.constant 0 : i32
    %c0_i32_0 = arith.constant 0 : i32
    %c0_i32_1 = arith.constant 0 : i32
    return %c0_i32, %c0_i32_0 : i32, i32
  }
  func.func @transform_5(%arg0: i32) -> (i32, i32) {
    %c0_i32 = arith.constant 0 : i32
    %c0_i32_0 = arith.constant 0 : i32
    return %arg0, %c0_i32 : i32, i32
  }
}

</mosaic_0001>

<llo_original>
// kernel: tpu_custom_call.1
$region0: #{tpu_custom_call.1}
  #allocation0 [shape = 'u32[]', space=smem, size = 0x4, offset = 0x4, fixed_abs, tag = 'smem constant byte address 0x4 - core index']
  #allocation1 [shape = 'u32[144,128]{1,0:T(1,128)}', space=vmem, size = 0x12000, scoped, tag = 'internal scratch']
  %s0 = inlined_call_operand.hbm [shape: bf16[128,128], index: 0, kind: input, shape index: {}]
  %s1 = inlined_call_operand.hbm [shape: bf16[128,384], index: 1, kind: input, shape index: {}]
  %s2 = inlined_call_operand.vmem [shape: f32[1,384], index: 2, kind: input, shape index: {}]
  %s3 = inlined_call_operand.hbm [shape: bf16[384,128], index: 3, kind: input, shape index: {}]
  %s4 = inlined_call_operand.vmem [shape: f32[1,128], index: 4, kind: input, shape index: {}]
  %s5 = inlined_call_operand.hbm [shape: f32[128,128], index: 5, kind: output, shape index: {}]
  %s6 = sld [smem:[#allocation0]]
  $region65: #{tpu_custom_call.1} parent=0
    _
  %s8 = ssub.s32 1, %s6
  %s9 = scalar_select 0, %s8, %s6
  $region1: #{tpu_custom_call.1} parent=0
    #allocation2 [shape = 'u8[32768]{0}', space=vmem, size = 0x8000, scoped, tag = 'input window, operand 0']
    #allocation3 [shape = 's32[2]{0}', space=sflag, size = 0x8, scoped, tag = 'scoped memory for tpu_custom_call.1']
    #allocation4 [shape = 's32[2]{0}', space=sflag, size = 0x8, scoped, tag = 'scoped memory for tpu_custom_call.1']
    #allocation5 [shape = 'u8[98304]{0}', space=vmem, size = 0x18000, scoped, tag = 'input window, operand 1, single buffered']
    #allocation6 [shape = 's32[1]{0}', space=sflag, size = 0x4, scoped, tag = 'scoped memory for tpu_custom_call.1']
    #allocation7 [shape = 'u8[98304]{0}', space=vmem, size = 0x18000, scoped, tag = 'input window, operand 3, single buffered']
    #allocation8 [shape = 'u8[65536]{0}', space=vmem, size = 0x10000, scoped, tag = 'output window, operand 0']
    %10 = vsyncpa [#allocation3], 0
    %s11 = scalar_lea.sflag [#allocation3], 1
    %12 = vsyncpa %s11, 0
    %13 = vsyncpa [#allocation6], 0
    %14 = vsyncpa [#allocation4], 0
    %s15 = scalar_lea.sflag [#allocation4], 1
    %16 = vsyncpa %s15, 0
    loop: start=0, step=1, limit=4
    $region2: #{tpu_custom_call.1} parent=1 // loop_pre_header
      _
    $region3: #{tpu_custom_call.1} parent=1 // loop_header
      %s18 = sphi 0, %s22
      %p19 = scmp.ge.s32.totalorder %s18, 4
      %s28 = sphi 0, %s30
      %s31 = sphi 0, %s28
      %s32 = sphi 0, %s31
      %s48 = sphi 0, %s32
      %s52 = sphi 0, %s52
      %s54 = sphi 0, %s52
      %s55 = sphi 0, %s54
      %s69 = sphi 0, %s55
      %s73 = sphi 0, %s73
      %s75 = sphi 0, %s73
      %s76 = sphi 0, %s75
      %s90 = sphi 0, %s76
      %s94 = sphi 0, %s94
      %s96 = sphi 0, %s94
      %s97 = sphi 0, %s96
      %s111 = sphi 0, %s97
      %s115 = sphi 0, %s115
      %s117 = sphi 0, %s115
      %s118 = sphi 0, %s117
      %s132 = sphi 0, %s118
      %s138 = sphi 0, %s140
      %s141 = sphi 0, %s138
      %s142 = sphi 0, %s141
      %s158 = sphi 0, %s142
    $region4: #{tpu_custom_call.1} parent=1 // loop_header_branch
      %21 = sbr.rel (%p19) target = $region8
    $region5: #{tpu_custom_call.1} parent=1 // loop_body
      %s23 = ssub.s32 %s18, 1
      %s24 = ssub.s32 %s18, 2
      %s25 = sadd.s32 %s18, 1
      %s26 = ssub.s32 %s18, %s25
      %p27 = scmp.eq.s32.totalorder %s26, 0
      %s29 = sadd.s32 %s28, 1
      %s30 = scalar_select %p27, %s28, %s29
      %p33 = pneg %p27
      %p34 = scmp.eq.s32.totalorder %s18, 1
      %p35 = por %p33, %p34
      %p36 = scmp.ne.s32.totalorder %s28, %s31
      %p37 = scmp.eq.s32.totalorder %s18, 0
      %p38 = por %p36, %p37
      %p39 = scmp.ne.s32.totalorder %s28, %s31
      %p40 = scmp.eq.s32.totalorder %s23, 1
      %p41 = por %p39, %p40
      %p42 = scmp.ne.s32.totalorder %s31, %s32
      %p43 = scmp.eq.s32.totalorder %s23, 0
      %p44 = por %p42, %p43
      %p45 = scmp.ne.s32.totalorder %s31, %s32
      %p46 = scmp.eq.s32.totalorder %s24, 1
      %p47 = por %p45, %p46
      %p49 = scmp.ne.s32.totalorder %s32, %s48
      %p50 = scmp.eq.s32.totalorder %s24, 0
      %p51 = por %p49, %p50
      %s53 = sadd.s32 %s52, 1
      %p56 = scmp.eq.s32.totalorder %s18, 1
      %p57 = scmp.ne.s32.totalorder %s52, %s54
      %p58 = scmp.eq.s32.totalorder %s18, 0
      %p59 = por %p57, %p58
      %p60 = scmp.ne.s32.totalorder %s52, %s54
      %p61 = scmp.eq.s32.totalorder %s23, 1
      %p62 = por %p60, %p61
      %p63 = scmp.ne.s32.totalorder %s54, %s55
      %p64 = scmp.eq.s32.totalorder %s23, 0
      %p65 = por %p63, %p64
      %p66 = scmp.ne.s32.totalorder %s54, %s55
      %p67 = scmp.eq.s32.totalorder %s24, 1
      %p68 = por %p66, %p67
      %p70 = scmp.ne.s32.totalorder %s55, %s69
      %p71 = scmp.eq.s32.totalorder %s24, 0
      %p72 = por %p70, %p71
      %s74 = sadd.s32 %s73, 1
      %p77 = scmp.eq.s32.totalorder %s18, 1
      %p78 = scmp.ne.s32.totalorder %s73, %s75
      %p79 = scmp.eq.s32.totalorder %s18, 0
      %p80 = por %p78, %p79
      %p81 = scmp.ne.s32.totalorder %s73, %s75
      %p82 = scmp.eq.s32.totalorder %s23, 1
      %p83 = por %p81, %p82
      %p84 = scmp.ne.s32.totalorder %s75, %s76
      %p85 = scmp.eq.s32.totalorder %s23, 0
      %p86 = por %p84, %p85
      %p87 = scmp.ne.s32.totalorder %s75, %s76
      %p88 = scmp.eq.s32.totalorder %s24, 1
      %p89 = por %p87, %p88
      %p91 = scmp.ne.s32.totalorder %s76, %s90
      %p92 = scmp.eq.s32.totalorder %s24, 0
      %p93 = por %p91, %p92
      %s95 = sadd.s32 %s94, 1
      %p98 = scmp.eq.s32.totalorder %s18, 1
      %p99 = scmp.ne.s32.totalorder %s94, %s96
      %p100 = scmp.eq.s32.totalorder %s18, 0
      %p101 = por %p99, %p100
      %p102 = scmp.ne.s32.totalorder %s94, %s96
      %p103 = scmp.eq.s32.totalorder %s23, 1
      %p104 = por %p102, %p103
      %p105 = scmp.ne.s32.totalorder %s96, %s97
      %p106 = scmp.eq.s32.totalorder %s23, 0
      %p107 = por %p105, %p106
      %p108 = scmp.ne.s32.totalorder %s96, %s97
      %p109 = scmp.eq.s32.totalorder %s24, 1
      %p110 = por %p108, %p109
      %p112 = scmp.ne.s32.totalorder %s97, %s111
      %p113 = scmp.eq.s32.totalorder %s24, 0
      %p114 = por %p112, %p113
      %s116 = sadd.s32 %s115, 1
      %p119 = scmp.eq.s32.totalorder %s18, 1
      %p120 = scmp.ne.s32.totalorder %s115, %s117
      %p121 = scmp.eq.s32.totalorder %s18, 0
      %p122 = por %p120, %p121
      %p123 = scmp.ne.s32.totalorder %s115, %s117
      %p124 = scmp.eq.s32.totalorder %s23, 1
      %p125 = por %p123, %p124
      %p126 = scmp.ne.s32.totalorder %s117, %s118
      %p127 = scmp.eq.s32.totalorder %s23, 0
      %p128 = por %p126, %p127
      %p129 = scmp.ne.s32.totalorder %s117, %s118
      %p130 = scmp.eq.s32.totalorder %s24, 1
      %p131 = por %p129, %p130
      %p133 = scmp.ne.s32.totalorder %s118, %s132
      %p134 = scmp.eq.s32.totalorder %s24, 0
      %p135 = por %p133, %p134
      %s136 = ssub.s32 %s18, %s25
      %p137 = scmp.eq.s32.totalorder %s136, 0
      %s139 = sadd.s32 %s138, 1
      %s140 = scalar_select %p137, %s138, %s139
      %p143 = pneg %p137
      %p144 = scmp.eq.s32.totalorder %s18, 1
      %p145 = por %p143, %p144
      %p146 = scmp.ne.s32.totalorder %s138, %s141
      %p147 = scmp.eq.s32.totalorder %s18, 0
      %p148 = por %p146, %p147
      %p149 = scmp.ne.s32.totalorder %s138, %s141
      %p150 = scmp.eq.s32.totalorder %s23, 1
      %p151 = por %p149, %p150
      %p152 = scmp.ne.s32.totalorder %s141, %s142
      %p153 = scmp.eq.s32.totalorder %s23, 0
      %p154 = por %p152, %p153
      %p155 = scmp.ne.s32.totalorder %s141, %s142
      %p156 = scmp.eq.s32.totalorder %s24, 1
      %p157 = por %p155, %p156
      %p159 = scmp.ne.s32.totalorder %s142, %s158
      %p160 = scmp.eq.s32.totalorder %s24, 0
      %p161 = por %p159, %p160
      %p162 = scmp.le.s32.totalorder 1, %s18
      %p163 = scmp.lt.s32.totalorder %s18, 3
      %p164 = pnand %p162, %p163
      %p165 = pneg %p164
      // Predicated region
      $region9: #{tpu_custom_call.1} parent=5 // pred_check
        _
      $region10: #{tpu_custom_call.1} parent=5 // pred_check_branch
        %167 = sbr.rel (%p164) target = $region12
      $region11: #{tpu_custom_call.1} parent=5 // pred_region
        %s168 = ssub.s32 %s18, 1
        // Predicated region
        $region13: #{tpu_custom_call.1} parent=11 // pred_check
          %p169 = pneg %p65
        $region14: #{tpu_custom_call.1} parent=11 // pred_check_branch
          %171 = sbr.rel (%p169) target = $region16
        $region15: #{tpu_custom_call.1} parent=11 // pred_region
          %s173 = ssub.s32 3072, 3072
          %174 = vsyncadd [#allocation6], %s173
          %s175 = sshll.u32 [#allocation5], 4
          %s176 = int_to_ptr.vmem [resolvable:$true] %s175
          %181 = dma.hbm_to_vmem [thread:$0]  %s1, 3072, %s176, [#allocation6], 192, 192, 12
        $region16: #{tpu_custom_call.1} parent=11 // pred_fallthru
          _
        // Predicated region
        $region17: #{tpu_custom_call.1} parent=11 // pred_check
          %p182 = pneg %p86
        $region18: #{tpu_custom_call.1} parent=11 // pred_check_branch
          %184 = sbr.rel (%p182) target = $region20
        $region19: #{tpu_custom_call.1} parent=11 // pred_region
          _
        $region20: #{tpu_custom_call.1} parent=11 // pred_fallthru
          _
        // Predicated region
        $region21: #{tpu_custom_call.1} parent=11 // pred_check
          %p185 = pneg %p107
        $region22: #{tpu_custom_call.1} parent=11 // pred_check_branch
          %187 = sbr.rel (%p185) target = $region24
        $region23: #{tpu_custom_call.1} parent=11 // pred_region
          %s189 = ssub.s32 3072, 3072
          %190 = vsyncadd [#allocation6], %s189
          %s191 = sshll.u32 [#allocation7], 4
          %s192 = int_to_ptr.vmem [resolvable:$true] %s191
          %197 = dma.hbm_to_vmem [thread:$0]  %s3, 3072, %s192, [#allocation6], 64, 64, 4
        $region24: #{tpu_custom_call.1} parent=11 // pred_fallthru
          _
        // Predicated region
        $region25: #{tpu_custom_call.1} parent=11 // pred_check
          %p198 = pneg %p128
        $region26: #{tpu_custom_call.1} parent=11 // pred_check_branch
          %200 = sbr.rel (%p198) target = $region28
        $region27: #{tpu_custom_call.1} parent=11 // pred_region
          _
        $region28: #{tpu_custom_call.1} parent=11 // pred_fallthru
          _
      $region12: #{tpu_custom_call.1} parent=5 // pred_fallthru
        _
      %p201 = scmp.lt.s32.totalorder %s18, 2
      // Predicated region
      $region29: #{tpu_custom_call.1} parent=5 // pred_check
        %p202 = pneg %p201
      $region30: #{tpu_custom_call.1} parent=5 // pred_check_branch
        %204 = sbr.rel (%p202) target = $region32
      $region31: #{tpu_custom_call.1} parent=5 // pred_region
        // Predicated region
        $region33: #{tpu_custom_call.1} parent=31 // pred_check
          %p205 = pneg %p38
        $region34: #{tpu_custom_call.1} parent=31 // pred_check_branch
          %207 = sbr.rel (%p205) target = $region36
        $region35: #{tpu_custom_call.1} parent=31 // pred_region
          %s208 = sand.u32 %s28, 1
          %s209 = scalar_lea.sflag [#allocation3], %s208
          %s210 = sand.u32 %s28, 1
          %s211 = smul.addr %s210, 32
          %s212 = scalar_lea.vmem [#allocation2], %s211
          %s213 = smul.u32 8, %s18
          %s215 = ssub.s32 512, 512
          %216 = vsyncadd %s209, %s215
          %s217 = smul.addr %s213, 64
          %s218 = scalar_lea.hbm %s0, %s217
          %s219 = sshll.u32 %s212, 4
          %s220 = int_to_ptr.vmem [resolvable:$true] %s219
          %225 = dma.hbm_to_vmem [thread:$0]  %s218, 512, %s220, %s209, 64, 64, 4
        $region36: #{tpu_custom_call.1} parent=31 // pred_fallthru
          _
      $region32: #{tpu_custom_call.1} parent=5 // pred_fallthru
        _
      %p226 = scmp.le.s32.totalorder 1, %s18
      %p227 = scmp.lt.s32.totalorder %s18, 3
      %p228 = pnand %p226, %p227
      %p229 = pneg %p228
      // Predicated region
      $region37: #{tpu_custom_call.1} parent=5 // pred_check
        _
      $region38: #{tpu_custom_call.1} parent=5 // pred_check_branch
        %231 = sbr.rel (%p228) target = $region40
      $region39: #{tpu_custom_call.1} parent=5 // pred_region
        %s232 = ssub.s32 %s18, 1
        %s233 = sand.u32 %s31, 1
        %s234 = scalar_lea.sflag [#allocation3], %s233
        %s235 = sand.u32 %s31, 1
        %s236 = smul.addr %s235, 32
        %s237 = scalar_lea.vmem [#allocation2], %s236
        // Predicated region
        $region41: #{tpu_custom_call.1} parent=39 // pred_check
          %p238 = pneg %p44
        $region42: #{tpu_custom_call.1} parent=39 // pred_check_branch
          %240 = sbr.rel (%p238) target = $region44
        $region43: #{tpu_custom_call.1} parent=39 // pred_region
          %241 = dma.done %s234, 512
        $region44: #{tpu_custom_call.1} parent=39 // pred_fallthru
          _
        // Predicated region
        $region45: #{tpu_custom_call.1} parent=39 // pred_check
          %p242 = pneg %p65
        $region46: #{tpu_custom_call.1} parent=39 // pred_check_branch
          %244 = sbr.rel (%p242) target = $region48
        $region47: #{tpu_custom_call.1} parent=39 // pred_region
          %245 = dma.done [#allocation6], 3072
        $region48: #{tpu_custom_call.1} parent=39 // pred_fallthru
          _
        // Predicated region
        $region49: #{tpu_custom_call.1} parent=39 // pred_check
          %p246 = pneg %p107
        $region50: #{tpu_custom_call.1} parent=39 // pred_check_branch
          %248 = sbr.rel (%p246) target = $region52
        $region51: #{tpu_custom_call.1} parent=39 // pred_region
          %249 = dma.done [#allocation6], 3072
        $region52: #{tpu_custom_call.1} parent=39 // pred_fallthru
          _
        %s250 = sand.u32 %s31, 1
        %s251 = scalar_lea.sflag [#allocation3], %s250
        %s252 = sand.u32 %s31, 1
        %s253 = smul.addr %s252, 32
        %s254 = scalar_lea.vmem [#allocation2], %s253
        %p255 = pneg %p44
        %p256 = pneg %p41
        %p257 = pneg %p65
        %p258 = pneg %p62
        %p259 = pneg %p86
        %p260 = pneg %p83
        %p261 = pneg %p107
        %p262 = pneg %p104
        %p263 = pneg %p128
        %p264 = pneg %p125
        %p265 = pneg %p154
        %p266 = pneg %p151
        %s267 = sand.u32 %s141, 1
        %s268 = scalar_lea.sflag [#allocation4], %s267
        %s269 = sand.u32 %s141, 1
        %s270 = smul.addr %s269, 64
        %s271 = scalar_lea.vmem [#allocation8], %s270
        %s272 = smul.u32 8, %s23
        %s273 = smul.u32 8, %s23
        %v275 = vld [vmem:[%s237] sm:$0xf]
        %v276 = vld [vmem:[%s237 + $0x4] sm:$0xf]
        %v277 = vld [vmem:[%s237 + $0x8] sm:$0xf]
        %v278 = vld [vmem:[%s237 + $0xc] sm:$0xf]
        %v279 = vld [vmem:[%s237 + $0x10] sm:$0xf]
        %v280 = vld [vmem:[%s237 + $0x14] sm:$0xf]
        %v281 = vld [vmem:[%s237 + $0x18] sm:$0xf]
        %v282 = vld [vmem:[%s237 + $0x1c] sm:$0xf]
        %v283 = vld [vmem:[#allocation5] sm:$0xff]
        %v284 = vld [vmem:[#allocation5 + $0x8] sm:$0xf]
        %v285 = vld [vmem:[#allocation5 + $0xc] sm:$0xff]
        %v286 = vld [vmem:[#allocation5 + $0x14] sm:$0xf]
        %v287 = vld [vmem:[#allocation5 + $0x18] sm:$0xff]
        %v288 = vld [vmem:[#allocation5 + $0x20] sm:$0xf]
        %v289 = vld [vmem:[#allocation5 + $0x24] sm:$0xff]
        %v290 = vld [vmem:[#allocation5 + $0x2c] sm:$0xf]
        %v291 = vld [vmem:[#allocation5 + $0x30] sm:$0xff]
        %v292 = vld [vmem:[#allocation5 + $0x38] sm:$0xf]
        %v293 = vld [vmem:[#allocation5 + $0x3c] sm:$0xff]
        %v294 = vld [vmem:[#allocation5 + $0x44] sm:$0xf]
        %v295 = vld [vmem:[#allocation5 + $0x48] sm:$0xff]
        %v296 = vld [vmem:[#allocation5 + $0x50] sm:$0xf]
        %v297 = vld [vmem:[#allocation5 + $0x54] sm:$0xff]
        %v298 = vld [vmem:[#allocation5 + $0x5c] sm:$0xf]
        %v299 = vld [vmem:[#allocation5 + $0x60] sm:$0xff]
        %v300 = vld [vmem:[#allocation5 + $0x68] sm:$0xf]
        %v301 = vld [vmem:[#allocation5 + $0x6c] sm:$0xff]
        %v302 = vld [vmem:[#allocation5 + $0x74] sm:$0xf]
        %v303 = vld [vmem:[#allocation5 + $0x78] sm:$0xff]
        %v304 = vld [vmem:[#allocation5 + $0x80] sm:$0xf]
        %v305 = vld [vmem:[#allocation5 + $0x84] sm:$0xff]
        %v306 = vld [vmem:[#allocation5 + $0x8c] sm:$0xf]
        %v307 = vld [vmem:[#allocation5 + $0x90] sm:$0xff]
        %v308 = vld [vmem:[#allocation5 + $0x98] sm:$0xf]
        %v309 = vld [vmem:[#allocation5 + $0x9c] sm:$0xff]
        %v310 = vld [vmem:[#allocation5 + $0xa4] sm:$0xf]
        %v311 = vld [vmem:[#allocation5 + $0xa8] sm:$0xff]
        %v312 = vld [vmem:[#allocation5 + $0xb0] sm:$0xf]
        %v313 = vld [vmem:[#allocation5 + $0xb4] sm:$0xff]
        %v314 = vld [vmem:[#allocation5 + $0xbc] sm:$0xf]
        %v315 = vld [vmem:[%s2] sm:$0x7]
        %v317 = vlaneseq
        %v318 = vshrl.u32 %v317, 7
        %v319 = vsub.s32 0, %v318
        %v320 = vrot.slane %v315, %v319
        %v321 = vlaneseq
        %v322 = vshrl.u32 %v321, 7
        %v323 = vsub.s32 1, %v322
        %v324 = vrot.slane %v315, %v323
        %v325 = vlaneseq
        %v326 = vshrl.u32 %v325, 7
        %v327 = vsub.s32 2, %v326
        %v328 = vrot.slane %v315, %v327
        %v340 = vunpack.c.l.b16 %v275
        %v341 = vunpack.c.l.b16 %v276
        %v342 = vunpack.c.l.b16 %v277
        %v343 = vunpack.c.l.b16 %v278
        %v344 = vunpack.c.l.b16 %v279
        %v345 = vunpack.c.l.b16 %v280
        %v346 = vunpack.c.l.b16 %v281
        %v347 = vunpack.c.l.b16 %v282
        %v348 = vpack.c.b16 %v341, %v340
        %v349 = vpack.c.b16 %v343, %v342
        %v350 = vpack.c.b16 %v345, %v344
        %v351 = vpack.c.b16 %v347, %v346
        %v388 = vunpack.c.l.b16 %v283
        %v389 = vunpack.c.h.b16 %v283
        %v390 = vunpack.c.l.b16 %v284
        %v391 = vunpack.c.l.b16 %v285
        %v392 = vunpack.c.h.b16 %v285
        %v393 = vunpack.c.l.b16 %v286
        %v394 = vunpack.c.l.b16 %v287
        %v395 = vunpack.c.h.b16 %v287
        %v396 = vunpack.c.l.b16 %v288
        %v397 = vunpack.c.l.b16 %v289
        %v398 = vunpack.c.h.b16 %v289
        %v399 = vunpack.c.l.b16 %v290
        %v400 = vunpack.c.l.b16 %v291
        %v401 = vunpack.c.h.b16 %v291
        %v402 = vunpack.c.l.b16 %v292
        %v403 = vunpack.c.l.b16 %v293
        %v404 = vunpack.c.h.b16 %v293
        %v405 = vunpack.c.l.b16 %v294
        %v406 = vunpack.c.l.b16 %v295
        %v407 = vunpack.c.h.b16 %v295
        %v408 = vunpack.c.l.b16 %v296
        %v409 = vunpack.c.l.b16 %v297
        %v410 = vunpack.c.h.b16 %v297
        %v411 = vunpack.c.l.b16 %v298
        %v412 = vunpack.c.l.b16 %v299
        %v413 = vunpack.c.h.b16 %v299
        %v414 = vunpack.c.l.b16 %v300
        %v415 = vunpack.c.l.b16 %v301
        %v416 = vunpack.c.h.b16 %v301
        %v417 = vunpack.c.l.b16 %v302
        %v418 = vunpack.c.l.b16 %v303
        %v419 = vunpack.c.h.b16 %v303
        %v420 = vunpack.c.l.b16 %v304
        %v421 = vunpack.c.l.b16 %v305
        %v422 = vunpack.c.h.b16 %v305
        %v423 = vunpack.c.l.b16 %v306
        %v424 = vunpack.c.l.b16 %v307
        %v425 = vunpack.c.h.b16 %v307
        %v426 = vunpack.c.l.b16 %v308
        %v427 = vunpack.c.l.b16 %v309
        %v428 = vunpack.c.h.b16 %v309
        %v429 = vunpack.c.l.b16 %v310
        %v430 = vunpack.c.l.b16 %v311
        %v431 = vunpack.c.h.b16 %v311
        %v432 = vunpack.c.l.b16 %v312
        %v433 = vunpack.c.l.b16 %v313
        %v434 = vunpack.c.h.b16 %v313
        %v435 = vunpack.c.l.b16 %v314
        %v436 = vpack.c.b16 %v391, %v388
        %v437 = vpack.c.b16 %v392, %v389
        %v438 = vpack.c.b16 %v393, %v390
        %v439 = vpack.c.b16 %v397, %v394
        %v440 = vpack.c.b16 %v398, %v395
        %v441 = vpack.c.b16 %v399, %v396
        %v442 = vpack.c.b16 %v403, %v400
        %v443 = vpack.c.b16 %v404, %v401
        %v444 = vpack.c.b16 %v405, %v402
        %v445 = vpack.c.b16 %v409, %v406
        %v446 = vpack.c.b16 %v410, %v407
        %v447 = vpack.c.b16 %v411, %v408
        %v448 = vpack.c.b16 %v415, %v412
        %v449 = vpack.c.b16 %v416, %v413
        %v450 = vpack.c.b16 %v417, %v414
        %v451 = vpack.c.b16 %v421, %v418
        %v452 = vpack.c.b16 %v422, %v419
        %v453 = vpack.c.b16 %v423, %v420
        %v454 = vpack.c.b16 %v427, %v424
        %v455 = vpack.c.b16 %v428, %v425
        %v456 = vpack.c.b16 %v429, %v426
        %v457 = vpack.c.b16 %v433, %v430
        %v458 = vpack.c.b16 %v434, %v431
        %v459 = vpack.c.b16 %v435, %v432
        %484 = vmatprep.subr.bf16.mxu0 %v437
        %485 = vmatpush1.bf16.msra.mxu0 %v436
        %486 = vmatprep.subr.bf16.mxu0 %v440
        %487 = vmatpush1.bf16.msra.mxu0 %v439
        %488 = vmatprep.subr.bf16.mxu0 %v443
        %489 = vmatpush1.bf16.msra.mxu0 %v442
        %490 = vmatprep.subr.bf16.mxu0 %v446
        %491 = vmatpush1.bf16.msra.mxu0 %v445
        %492 = vmatprep.subr.bf16.mxu0 %v449
        %493 = vmatpush1.bf16.msra.mxu0 %v448
        %494 = vmatprep.subr.bf16.mxu0 %v452
        %495 = vmatpush1.bf16.msra.mxu0 %v451
        %496 = vmatprep.subr.bf16.mxu0 %v455
        %497 = vmatpush1.bf16.msra.mxu0 %v454
        %498 = vmatprep.subr.bf16.mxu0 %v458
        %499 = vmatpush1.bf16.msra.mxu0 %v457
        %500 = vmatprep.subr.bf16.mxu0 0
        %501 = vmatpush1.bf16.msra.mxu0 0
        %502 = vmatprep.subr.bf16.mxu0 0
        %503 = vmatpush1.bf16.msra.mxu0 0
        %504 = vmatprep.subr.bf16.mxu0 0
        %505 = vmatpush1.bf16.msra.mxu0 0
        %506 = vmatprep.subr.bf16.mxu0 0
        %507 = vmatpush1.bf16.msra.mxu0 0
        %508 = vmatprep.subr.bf16.mxu0 0
        %509 = vmatpush1.bf16.msra.mxu0 0
        %510 = vmatprep.subr.bf16.mxu0 0
        %511 = vmatpush1.bf16.msra.mxu0 0
        %512 = vmatprep.subr.bf16.mxu0 0
        %513 = vmatpush1.bf16.msra.mxu0 0
        %514 = vmatprep.subr.bf16.mxu0 0
        %515 = vmatpush1.bf16.msra.mxu0 0
        %516 = vmatprep.mubr.bf16.mxu0 0
        %517 = vmatmul.mubr.bf16.gmra.mrb[0].mxu0 %v348
        %v518 = vpop.f32.mrb[0].mxu0
        %v519 = vadd.f32 %v320, %v518
        %v520 = vpop.f32.mrb[0].mxu0
        %v521 = vadd.f32 %v324, %v520
        %v522 = vpop.f32.mrb[0].mxu0
        %v523 = vadd.f32 %v320, %v522
        %v524 = vpop.f32.mrb[0].mxu0
        %v525 = vadd.f32 %v324, %v524
        %526 = vmatprep.mubr.bf16.mxu0 0
        %527 = vmatmul.mubr.bf16.gmra.mrb[0].mxu0 %v349
        %v528 = vpop.f32.mrb[0].mxu0
        %v529 = vadd.f32 %v320, %v528
        %v530 = vpop.f32.mrb[0].mxu0
        %v531 = vadd.f32 %v324, %v530
        %v532 = vpop.f32.mrb[0].mxu0
        %v533 = vadd.f32 %v320, %v532
        %v534 = vpop.f32.mrb[0].mxu0
        %v535 = vadd.f32 %v324, %v534
        %536 = vmatprep.mubr.bf16.mxu0 0
        %537 = vmatmul.mubr.bf16.gmra.mrb[0].mxu0 %v350
        %v538 = vpop.f32.mrb[0].mxu0
        %v539 = vadd.f32 %v320, %v538
        %v540 = vpop.f32.mrb[0].mxu0
        %v541 = vadd.f32 %v324, %v540
        %v542 = vpop.f32.mrb[0].mxu0
        %v543 = vadd.f32 %v320, %v542
        %v544 = vpop.f32.mrb[0].mxu0
        %v545 = vadd.f32 %v324, %v544
        %546 = vmatprep.mubr.bf16.mxu0 0
        %547 = vmatmul.mubr.bf16.gmra.mrb[0].mxu0 %v351
        %v548 = vpop.f32.mrb[0].mxu0
        %v549 = vadd.f32 %v320, %v548
        %v550 = vpop.f32.mrb[0].mxu0
        %v551 = vadd.f32 %v324, %v550
        %v552 = vpop.f32.mrb[0].mxu0
        %v553 = vadd.f32 %v320, %v552
        %v554 = vpop.f32.mrb[0].mxu0
        %v555 = vadd.f32 %v324, %v554
        %556 = vdwg.mxu0
        %557 = vmatprep.subr.bf16.mxu0 0
        %558 = vmatpush1.bf16.msra.mxu0 %v438
        %559 = vmatprep.subr.bf16.mxu0 0
        %560 = vmatpush1.bf16.msra.mxu0 %v441
        %561 = vmatprep.subr.bf16.mxu0 0
        %562 = vmatpush1.bf16.msra.mxu0 %v444
        %563 = vmatprep.subr.bf16.mxu0 0
        %564 = vmatpush1.bf16.msra.mxu0 %v447
        %565 = vmatprep.subr.bf16.mxu0 0
        %566 = vmatpush1.bf16.msra.mxu0 %v450
        %567 = vmatprep.subr.bf16.mxu0 0
        %568 = vmatpush1.bf16.msra.mxu0 %v453
        %569 = vmatprep.subr.bf16.mxu0 0
        %570 = vmatpush1.bf16.msra.mxu0 %v456
        %571 = vmatprep.subr.bf16.mxu0 0
        %572 = vmatpush1.bf16.msra.mxu0 %v459
        %573 = vmatprep.subr.bf16.mxu0 0
        %574 = vmatpush1.bf16.msra.mxu0 0
        %575 = vmatprep.subr.bf16.mxu0 0
        %576 = vmatpush1.bf16.msra.mxu0 0
        %577 = vmatprep.subr.bf16.mxu0 0
        %578 = vmatpush1.bf16.msra.mxu0 0
        %579 = vmatprep.subr.bf16.mxu0 0
        %580 = vmatpush1.bf16.msra.mxu0 0
        %581 = vmatprep.subr.bf16.mxu0 0
        %582 = vmatpush1.bf16.msra.mxu0 0
        %583 = vmatprep.subr.bf16.mxu0 0
        %584 = vmatpush1.bf16.msra.mxu0 0
        %585 = vmatprep.subr.bf16.mxu0 0
        %586 = vmatpush1.bf16.msra.mxu0 0
        %587 = vmatprep.subr.bf16.mxu0 0
        %588 = vmatpush1.bf16.msra.mxu0 0
        %589 = vmatprep.mubr.bf16.mxu0 0
        %590 = vmatmul.mubr.bf16.gmra.mrb[0].mxu0 %v348
        %v591 = vpop.f32.mrb[0].mxu0
        %v592 = vadd.f32 %v328, %v591
        %v593 = vpop.f32.mrb[0].mxu0
        %v594 = vpop.f32.mrb[0].mxu0
        %v595 = vadd.f32 %v328, %v594
        %v596 = vpop.f32.mrb[0].mxu0
        %597 = vmatprep.mubr.bf16.mxu0 0
        %598 = vmatmul.mubr.bf16.gmra.mrb[0].mxu0 %v349
        %v599 = vpop.f32.mrb[0].mxu0
        %v600 = vadd.f32 %v328, %v599
        %v601 = vpop.f32.mrb[0].mxu0
        %v602 = vpop.f32.mrb[0].mxu0
        %v603 = vadd.f32 %v328, %v602
        %v604 = vpop.f32.mrb[0].mxu0
        %605 = vmatprep.mubr.bf16.mxu0 0
        %606 = vmatmul.mubr.bf16.gmra.mrb[0].mxu0 %v350
        %v607 = vpop.f32.mrb[0].mxu0
        %v608 = vadd.f32 %v328, %v607
        %v609 = vpop.f32.mrb[0].mxu0
        %v610 = vpop.f32.mrb[0].mxu0
        %v611 = vadd.f32 %v328, %v610
        %v612 = vpop.f32.mrb[0].mxu0
        %613 = vmatprep.mubr.bf16.mxu0 0
        %614 = vmatmul.mubr.bf16.gmra.mrb[0].mxu0 %v351
        %v615 = vpop.f32.mrb[0].mxu0
        %v616 = vadd.f32 %v328, %v615
        %v617 = vpop.f32.mrb[0].mxu0
        %v618 = vpop.f32.mrb[0].mxu0
        %v619 = vadd.f32 %v328, %v618
        %v620 = vpop.f32.mrb[0].mxu0
        %621 = vdwg.mxu0
        %v622 = vmul.f32 %v519, %v519
        %v623 = vmul.f32 %v521, %v521
        %v624 = vmul.f32 %v592, %v592
        %v625 = vmul.f32 %v523, %v523
        %v626 = vmul.f32 %v525, %v525
        %v627 = vmul.f32 %v595, %v595
        %v628 = vmul.f32 %v529, %v529
        %v629 = vmul.f32 %v531, %v531
        %v630 = vmul.f32 %v600, %v600
        %v631 = vmul.f32 %v533, %v533
        %v632 = vmul.f32 %v535, %v535
        %v633 = vmul.f32 %v603, %v603
        %v634 = vmul.f32 %v539, %v539
        %v635 = vmul.f32 %v541, %v541
        %v636 = vmul.f32 %v608, %v608
        %v637 = vmul.f32 %v543, %v543
        %v638 = vmul.f32 %v545, %v545
        %v639 = vmul.f32 %v611, %v611
        %v640 = vmul.f32 %v549, %v549
        %v641 = vmul.f32 %v551, %v551
        %v642 = vmul.f32 %v616, %v616
        %v643 = vmul.f32 %v553, %v553
        %v644 = vmul.f32 %v555, %v555
        %v645 = vmul.f32 %v619, %v619
        %v646 = vmul.f32 %v519, %v622
        %v647 = vmul.f32 %v521, %v623
        %v648 = vmul.f32 %v592, %v624
        %v649 = vmul.f32 %v523, %v625
        %v650 = vmul.f32 %v525, %v626
        %v651 = vmul.f32 %v595, %v627
        %v652 = vmul.f32 %v529, %v628
        %v653 = vmul.f32 %v531, %v629
        %v654 = vmul.f32 %v600, %v630
        %v655 = vmul.f32 %v533, %v631
        %v656 = vmul.f32 %v535, %v632
        %v657 = vmul.f32 %v603, %v633
        %v658 = vmul.f32 %v539, %v634
        %v659 = vmul.f32 %v541, %v635
        %v660 = vmul.f32 %v608, %v636
        %v661 = vmul.f32 %v543, %v637
        %v662 = vmul.f32 %v545, %v638
        %v663 = vmul.f32 %v611, %v639
        %v664 = vmul.f32 %v549, %v640
        %v665 = vmul.f32 %v551, %v641
        %v666 = vmul.f32 %v616, %v642
        %v667 = vmul.f32 %v553, %v643
        %v668 = vmul.f32 %v555, %v644
        %v669 = vmul.f32 %v619, %v645
        %v670 = vmul.f32 %v646, 0.044715
        %v671 = vmul.f32 %v647, 0.044715
        %v672 = vmul.f32 %v648, 0.044715
        %v673 = vmul.f32 %v649, 0.044715
        %v674 = vmul.f32 %v650, 0.044715
        %v675 = vmul.f32 %v651, 0.044715
        %v676 = vmul.f32 %v652, 0.044715
        %v677 = vmul.f32 %v653, 0.044715
        %v678 = vmul.f32 %v654, 0.044715
        %v679 = vmul.f32 %v655, 0.044715
        %v680 = vmul.f32 %v656, 0.044715
        %v681 = vmul.f32 %v657, 0.044715
        %v682 = vmul.f32 %v658, 0.044715
        %v683 = vmul.f32 %v659, 0.044715
        %v684 = vmul.f32 %v660, 0.044715
        %v685 = vmul.f32 %v661, 0.044715
        %v686 = vmul.f32 %v662, 0.044715
        %v687 = vmul.f32 %v663, 0.044715
        %v688 = vmul.f32 %v664, 0.044715
        %v689 = vmul.f32 %v665, 0.044715
        %v690 = vmul.f32 %v666, 0.044715
        %v691 = vmul.f32 %v667, 0.044715
        %v692 = vmul.f32 %v668, 0.044715
        %v693 = vmul.f32 %v669, 0.044715
        %v694 = vadd.f32 %v519, %v670
        %v695 = vadd.f32 %v521, %v671
        %v696 = vadd.f32 %v592, %v672
        %v697 = vadd.f32 %v523, %v673
        %v698 = vadd.f32 %v525, %v674
        %v699 = vadd.f32 %v595, %v675
        %v700 = vadd.f32 %v529, %v676
        %v701 = vadd.f32 %v531, %v677
        %v702 = vadd.f32 %v600, %v678
        %v703 = vadd.f32 %v533, %v679
        %v704 = vadd.f32 %v535, %v680
        %v705 = vadd.f32 %v603, %v681
        %v706 = vadd.f32 %v539, %v682
        %v707 = vadd.f32 %v541, %v683
        %v708 = vadd.f32 %v608, %v684
        %v709 = vadd.f32 %v543, %v685
        %v710 = vadd.f32 %v545, %v686
        %v711 = vadd.f32 %v611, %v687
        %v712 = vadd.f32 %v549, %v688
        %v713 = vadd.f32 %v551, %v689
        %v714 = vadd.f32 %v616, %v690
        %v715 = vadd.f32 %v553, %v691
        %v716 = vadd.f32 %v555, %v692
        %v717 = vadd.f32 %v619, %v693
        %v718 = vmul.f32 %v694, 0.7978846
        %v719 = vmul.f32 %v695, 0.7978846
        %v720 = vmul.f32 %v696, 0.7978846
        %v721 = vmul.f32 %v697, 0.7978846
        %v722 = vmul.f32 %v698, 0.7978846
        %v723 = vmul.f32 %v699, 0.7978846
        %v724 = vmul.f32 %v700, 0.7978846
        %v725 = vmul.f32 %v701, 0.7978846
        %v726 = vmul.f32 %v702, 0.7978846
        %v727 = vmul.f32 %v703, 0.7978846
        %v728 = vmul.f32 %v704, 0.7978846
        %v729 = vmul.f32 %v705, 0.7978846
        %v730 = vmul.f32 %v706, 0.7978846
        %v731 = vmul.f32 %v707, 0.7978846
        %v732 = vmul.f32 %v708, 0.7978846
        %v733 = vmul.f32 %v709, 0.7978846
        %v734 = vmul.f32 %v710, 0.7978846
        %v735 = vmul.f32 %v711, 0.7978846
        %v736 = vmul.f32 %v712, 0.7978846
        %v737 = vmul.f32 %v713, 0.7978846
        %v738 = vmul.f32 %v714, 0.7978846
        %v739 = vmul.f32 %v715, 0.7978846
        %v740 = vmul.f32 %v716, 0.7978846
        %v741 = vmul.f32 %v717, 0.7978846
        %v742 = vtanh.pop %v718
        %v743 = vtanh.pop %v719
        %v744 = vtanh.pop %v720
        %v745 = vtanh.pop %v721
        %v746 = vtanh.pop %v722
        %v747 = vtanh.pop %v723
        %v748 = vtanh.pop %v724
        %v749 = vtanh.pop %v725
        %v750 = vtanh.pop %v726
        %v751 = vtanh.pop %v727
        %v752 = vtanh.pop %v728
        %v753 = vtanh.pop %v729
        %v754 = vtanh.pop %v730
        %v755 = vtanh.pop %v731
        %v756 = vtanh.pop %v732
        %v757 = vtanh.pop %v733
        %v758 = vtanh.pop %v734
        %v759 = vtanh.pop %v735
        %v760 = vtanh.pop %v736
        %v761 = vtanh.pop %v737
        %v762 = vtanh.pop %v738
        %v763 = vtanh.pop %v739
        %v764 = vtanh.pop %v740
        %v765 = vtanh.pop %v741
        %v766 = vadd.f32 %v742, 1.0
        %v767 = vadd.f32 %v743, 1.0
        %v768 = vadd.f32 %v744, 1.0
        %v769 = vadd.f32 %v745, 1.0
        %v770 = vadd.f32 %v746, 1.0
        %v771 = vadd.f32 %v747, 1.0
        %v772 = vadd.f32 %v748, 1.0
        %v773 = vadd.f32 %v749, 1.0
        %v774 = vadd.f32 %v750, 1.0
        %v775 = vadd.f32 %v751, 1.0
        %v776 = vadd.f32 %v752, 1.0
        %v777 = vadd.f32 %v753, 1.0
        %v778 = vadd.f32 %v754, 1.0
        %v779 = vadd.f32 %v755, 1.0
        %v780 = vadd.f32 %v756, 1.0
        %v781 = vadd.f32 %v757, 1.0
        %v782 = vadd.f32 %v758, 1.0
        %v783 = vadd.f32 %v759, 1.0
        %v784 = vadd.f32 %v760, 1.0
        %v785 = vadd.f32 %v761, 1.0
        %v786 = vadd.f32 %v762, 1.0
        %v787 = vadd.f32 %v763, 1.0
        %v788 = vadd.f32 %v764, 1.0
        %v789 = vadd.f32 %v765, 1.0
        %v790 = vmul.f32 %v766, 0.5
        %v791 = vmul.f32 %v767, 0.5
        %v792 = vmul.f32 %v768, 0.5
        %v793 = vmul.f32 %v769, 0.5
        %v794 = vmul.f32 %v770, 0.5
        %v795 = vmul.f32 %v771, 0.5
        %v796 = vmul.f32 %v772, 0.5
        %v797 = vmul.f32 %v773, 0.5
        %v798 = vmul.f32 %v774, 0.5
        %v799 = vmul.f32 %v775, 0.5
        %v800 = vmul.f32 %v776, 0.5
        %v801 = vmul.f32 %v777, 0.5
        %v802 = vmul.f32 %v778, 0.5
        %v803 = vmul.f32 %v779, 0.5
        %v804 = vmul.f32 %v780, 0.5
        %v805 = vmul.f32 %v781, 0.5
        %v806 = vmul.f32 %v782, 0.5
        %v807 = vmul.f32 %v783, 0.5
        %v808 = vmul.f32 %v784, 0.5
        %v809 = vmul.f32 %v785, 0.5
        %v810 = vmul.f32 %v786, 0.5
        %v811 = vmul.f32 %v787, 0.5
        %v812 = vmul.f32 %v788, 0.5
        %v813 = vmul.f32 %v789, 0.5
        %v814 = vmul.f32 %v519, %v790
        %v815 = vmul.f32 %v521, %v791
        %v816 = vmul.f32 %v592, %v792
        %v817 = vmul.f32 %v523, %v793
        %v818 = vmul.f32 %v525, %v794
        %v819 = vmul.f32 %v595, %v795
        %v820 = vmul.f32 %v529, %v796
        %v821 = vmul.f32 %v531, %v797
        %v822 = vmul.f32 %v600, %v798
        %v823 = vmul.f32 %v533, %v799
        %v824 = vmul.f32 %v535, %v800
        %v825 = vmul.f32 %v603, %v801
        %v826 = vmul.f32 %v539, %v802
        %v827 = vmul.f32 %v541, %v803
        %v828 = vmul.f32 %v608, %v804
        %v829 = vmul.f32 %v543, %v805
        %v830 = vmul.f32 %v545, %v806
        %v831 = vmul.f32 %v611, %v807
        %v832 = vmul.f32 %v549, %v808
        %v833 = vmul.f32 %v551, %v809
        %v834 = vmul.f32 %v616, %v810
        %v835 = vmul.f32 %v553, %v811
        %v836 = vmul.f32 %v555, %v812
        %v837 = vmul.f32 %v619, %v813
        %v838 = vpack.c.bf16 %v817, %v814
        %v839 = vpack.c.bf16 %v818, %v815
        %v840 = vpack.c.bf16 %v819, %v816
        %v841 = vpack.c.bf16 %v823, %v820
        %v842 = vpack.c.bf16 %v824, %v821
        %v843 = vpack.c.bf16 %v825, %v822
        %v844 = vpack.c.bf16 %v829, %v826
        %v845 = vpack.c.bf16 %v830, %v827
        %v846 = vpack.c.bf16 %v831, %v828
        %v847 = vpack.c.bf16 %v835, %v832
        %v848 = vpack.c.bf16 %v836, %v833
        %v849 = vpack.c.bf16 %v837, %v834
        %v850 = vld [vmem:[#allocation7] sm:$0xf]
        %v851 = vld [vmem:[#allocation7 + $0x4] sm:$0xf]
        %v852 = vld [vmem:[#allocation7 + $0x8] sm:$0xf]
        %v853 = vld [vmem:[#allocation7 + $0xc] sm:$0xf]
        %v854 = vld [vmem:[#allocation7 + $0x10] sm:$0xf]
        %v855 = vld [vmem:[#allocation7 + $0x14] sm:$0xf]
        %v856 = vld [vmem:[#allocation7 + $0x18] sm:$0xf]
        %v857 = vld [vmem:[#allocation7 + $0x1c] sm:$0xf]
        %v858 = vld [vmem:[#allocation7 + $0x20] sm:$0xf]
        %v859 = vld [vmem:[#allocation7 + $0x24] sm:$0xf]
        %v860 = vld [vmem:[#allocation7 + $0x28] sm:$0xf]
        %v861 = vld [vmem:[#allocation7 + $0x2c] sm:$0xf]
        %v862 = vld [vmem:[#allocation7 + $0x30] sm:$0xf]
        %v863 = vld [vmem:[#allocation7 + $0x34] sm:$0xf]
        %v864 = vld [vmem:[#allocation7 + $0x38] sm:$0xf]
        %v865 = vld [vmem:[#allocation7 + $0x3c] sm:$0xf]
        %v866 = vld [vmem:[#allocation7 + $0x40] sm:$0xf]
        %v867 = vld [vmem:[#allocation7 + $0x44] sm:$0xf]
        %v868 = vld [vmem:[#allocation7 + $0x48] sm:$0xf]
        %v869 = vld [vmem:[#allocation7 + $0x4c] sm:$0xf]
        %v870 = vld [vmem:[#allocation7 + $0x50] sm:$0xf]
        %v871 = vld [vmem:[#allocation7 + $0x54] sm:$0xf]
        %v872 = vld [vmem:[#allocation7 + $0x58] sm:$0xf]
        %v873 = vld [vmem:[#allocation7 + $0x5c] sm:$0xf]
        %v874 = vld [vmem:[#allocation7 + $0x60] sm:$0xf]
        %v875 = vld [vmem:[#allocation7 + $0x64] sm:$0xf]
        %v876 = vld [vmem:[#allocation7 + $0x68] sm:$0xf]
        %v877 = vld [vmem:[#allocation7 + $0x6c] sm:$0xf]
        %v878 = vld [vmem:[#allocation7 + $0x70] sm:$0xf]
        %v879 = vld [vmem:[#allocation7 + $0x74] sm:$0xf]
        %v880 = vld [vmem:[#allocation7 + $0x78] sm:$0xf]
        %v881 = vld [vmem:[#allocation7 + $0x7c] sm:$0xf]
        %v882 = vld [vmem:[#allocation7 + $0x80] sm:$0xf]
        %v883 = vld [vmem:[#allocation7 + $0x84] sm:$0xf]
        %v884 = vld [vmem:[#allocation7 + $0x88] sm:$0xf]
        %v885 = vld [vmem:[#allocation7 + $0x8c] sm:$0xf]
        %v886 = vld [vmem:[#allocation7 + $0x90] sm:$0xf]
        %v887 = vld [vmem:[#allocation7 + $0x94] sm:$0xf]
        %v888 = vld [vmem:[#allocation7 + $0x98] sm:$0xf]
        %v889 = vld [vmem:[#allocation7 + $0x9c] sm:$0xf]
        %v890 = vld [vmem:[#allocation7 + $0xa0] sm:$0xf]
        %v891 = vld [vmem:[#allocation7 + $0xa4] sm:$0xf]
        %v892 = vld [vmem:[#allocation7 + $0xa8] sm:$0xf]
        %v893 = vld [vmem:[#allocation7 + $0xac] sm:$0xf]
        %v894 = vld [vmem:[#allocation7 + $0xb0] sm:$0xf]
        %v895 = vld [vmem:[#allocation7 + $0xb4] sm:$0xf]
        %v896 = vld [vmem:[#allocation7 + $0xb8] sm:$0xf]
        %v897 = vld [vmem:[#allocation7 + $0xbc] sm:$0xf]
        %v898 = vld [vmem:[%s4] sm:$0x1]
        %v900 = vlaneseq
        %v901 = vshrl.u32 %v900, 7
        %v902 = vsub.s32 0, %v901
        %v903 = vrot.slane %v898, %v902
        %v953 = vunpack.c.l.b16 %v850
        %v954 = vunpack.c.l.b16 %v851
        %v955 = vunpack.c.l.b16 %v852
        %v956 = vunpack.c.l.b16 %v853
        %v957 = vunpack.c.l.b16 %v854
        %v958 = vunpack.c.l.b16 %v855
        %v959 = vunpack.c.l.b16 %v856
        %v960 = vunpack.c.l.b16 %v857
        %v961 = vunpack.c.l.b16 %v858
        %v962 = vunpack.c.l.b16 %v859
        %v963 = vunpack.c.l.b16 %v860
        %v964 = vunpack.c.l.b16 %v861
        %v965 = vunpack.c.l.b16 %v862
        %v966 = vunpack.c.l.b16 %v863
        %v967 = vunpack.c.l.b16 %v864
        %v968 = vunpack.c.l.b16 %v865
        %v969 = vunpack.c.l.b16 %v866
        %v970 = vunpack.c.l.b16 %v867
        %v971 = vunpack.c.l.b16 %v868
        %v972 = vunpack.c.l.b16 %v869
        %v973 = vunpack.c.l.b16 %v870
        %v974 = vunpack.c.l.b16 %v871
        %v975 = vunpack.c.l.b16 %v872
        %v976 = vunpack.c.l.b16 %v873
        %v977 = vunpack.c.l.b16 %v874
        %v978 = vunpack.c.l.b16 %v875
        %v979 = vunpack.c.l.b16 %v876
        %v980 = vunpack.c.l.b16 %v877
        %v981 = vunpack.c.l.b16 %v878
        %v982 = vunpack.c.l.b16 %v879
        %v983 = vunpack.c.l.b16 %v880
        %v984 = vunpack.c.l.b16 %v881
        %v985 = vunpack.c.l.b16 %v882
        %v986 = vunpack.c.l.b16 %v883
        %v987 = vunpack.c.l.b16 %v884
        %v988 = vunpack.c.l.b16 %v885
        %v989 = vunpack.c.l.b16 %v886
        %v990 = vunpack.c.l.b16 %v887
        %v991 = vunpack.c.l.b16 %v888
        %v992 = vunpack.c.l.b16 %v889
        %v993 = vunpack.c.l.b16 %v890
        %v994 = vunpack.c.l.b16 %v891
        %v995 = vunpack.c.l.b16 %v892
        %v996 = vunpack.c.l.b16 %v893
        %v997 = vunpack.c.l.b16 %v894
        %v998 = vunpack.c.l.b16 %v895
        %v999 = vunpack.c.l.b16 %v896
        %v1000 = vunpack.c.l.b16 %v897
        %v1001 = vpack.c.b16 %v954, %v953
        %v1002 = vpack.c.b16 %v956, %v955
        %v1003 = vpack.c.b16 %v958, %v957
        %v1004 = vpack.c.b16 %v960, %v959
        %v1005 = vpack.c.b16 %v962, %v961
        %v1006 = vpack.c.b16 %v964, %v963
        %v1007 = vpack.c.b16 %v966, %v965
        %v1008 = vpack.c.b16 %v968, %v967
        %v1009 = vpack.c.b16 %v970, %v969
        %v1010 = vpack.c.b16 %v972, %v971
        %v1011 = vpack.c.b16 %v974, %v973
        %v1012 = vpack.c.b16 %v976, %v975
        %v1013 = vpack.c.b16 %v978, %v977
        %v1014 = vpack.c.b16 %v980, %v979
        %v1015 = vpack.c.b16 %v982, %v981
        %v1016 = vpack.c.b16 %v984, %v983
        %v1017 = vpack.c.b16 %v986, %v985
        %v1018 = vpack.c.b16 %v988, %v987
        %v1019 = vpack.c.b16 %v990, %v989
        %v1020 = vpack.c.b16 %v992, %v991
        %v1021 = vpack.c.b16 %v994, %v993
        %v1022 = vpack.c.b16 %v996, %v995
        %v1023 = vpack.c.b16 %v998, %v997
        %v1024 = vpack.c.b16 %v1000, %v999
        %1049 = vmatprep.subr.bf16.mxu0 0
        %1050 = vmatpush1.bf16.msra.mxu0 %v1001
        %1051 = vmatprep.subr.bf16.mxu0 0
        %1052 = vmatpush1.bf16.msra.mxu0 %v1002
        %1053 = vmatprep.subr.bf16.mxu0 0
        %1054 = vmatpush1.bf16.msra.mxu0 %v1003
        %1055 = vmatprep.subr.bf16.mxu0 0
        %1056 = vmatpush1.bf16.msra.mxu0 %v1004
        %1057 = vmatprep.subr.bf16.mxu0 0
        %1058 = vmatpush1.bf16.msra.mxu0 %v1005
        %1059 = vmatprep.subr.bf16.mxu0 0
        %1060 = vmatpush1.bf16.msra.mxu0 %v1006
        %1061 = vmatprep.subr.bf16.mxu0 0
        %1062 = vmatpush1.bf16.msra.mxu0 %v1007
        %1063 = vmatprep.subr.bf16.mxu0 0
        %1064 = vmatpush1.bf16.msra.mxu0 %v1008
        %1065 = vmatprep.subr.bf16.mxu0 0
        %1066 = vmatpush1.bf16.msra.mxu0 %v1009
        %1067 = vmatprep.subr.bf16.mxu0 0
        %1068 = vmatpush1.bf16.msra.mxu0 %v1010
        %1069 = vmatprep.subr.bf16.mxu0 0
        %1070 = vmatpush1.bf16.msra.mxu0 %v1011
        %1071 = vmatprep.subr.bf16.mxu0 0
        %1072 = vmatpush1.bf16.msra.mxu0 %v1012
        %1073 = vmatprep.subr.bf16.mxu0 0
        %1074 = vmatpush1.bf16.msra.mxu0 %v1013
        %1075 = vmatprep.subr.bf16.mxu0 0
        %1076 = vmatpush1.bf16.msra.mxu0 %v1014
        %1077 = vmatprep.subr.bf16.mxu0 0
        %1078 = vmatpush1.bf16.msra.mxu0 %v1015
        %1079 = vmatprep.subr.bf16.mxu0 0
        %1080 = vmatpush1.bf16.msra.mxu0 %v1016
        %1081 = vmatprep.mubr.bf16.mxu0 %v839
        %1082 = vmatmul.mubr.bf16.gmra.mrb[0].mxu0 %v838
        %v1083 = vpop.f32.mrb[0].mxu0
        %v1084 = vadd.f32 %v903, %v1083
        %v1085 = vpop.f32.mrb[0].mxu0
        %v1086 = vpop.f32.mrb[0].mxu0
        %v1087 = vadd.f32 %v903, %v1086
        %v1088 = vpop.f32.mrb[0].mxu0
        %1089 = vmatprep.mubr.bf16.mxu0 %v842
        %1090 = vmatmul.mubr.bf16.gmra.mrb[0].mxu0 %v841
        %v1091 = vpop.f32.mrb[0].mxu0
        %v1092 = vadd.f32 %v903, %v1091
        %v1093 = vpop.f32.mrb[0].mxu0
        %v1094 = vpop.f32.mrb[0].mxu0
        %v1095 = vadd.f32 %v903, %v1094
        %v1096 = vpop.f32.mrb[0].mxu0
        %1097 = vmatprep.mubr.bf16.mxu0 %v845
        %1098 = vmatmul.mubr.bf16.gmra.mrb[0].mxu0 %v844
        %v1099 = vpop.f32.mrb[0].mxu0
        %v1100 = vadd.f32 %v903, %v1099
        %v1101 = vpop.f32.mrb[0].mxu0
        %v1102 = vpop.f32.mrb[0].mxu0
        %v1103 = vadd.f32 %v903, %v1102
        %v1104 = vpop.f32.mrb[0].mxu0
        %1105 = vmatprep.mubr.bf16.mxu0 %v848
        %1106 = vmatmul.mubr.bf16.gmra.mrb[0].mxu0 %v847
        %v1107 = vpop.f32.mrb[0].mxu0
        %v1108 = vadd.f32 %v903, %v1107
        %v1109 = vpop.f32.mrb[0].mxu0
        %v1110 = vpop.f32.mrb[0].mxu0
        %v1111 = vadd.f32 %v903, %v1110
        %v1112 = vpop.f32.mrb[0].mxu0
        %1113 = vdwg.mxu0
        %1114 = vmatprep.subr.bf16.mxu0 0
        %1115 = vmatpush1.bf16.msra.mxu0 %v1017
        %1116 = vmatprep.subr.bf16.mxu0 0
        %1117 = vmatpush1.bf16.msra.mxu0 %v1018
        %1118 = vmatprep.subr.bf16.mxu0 0
        %1119 = vmatpush1.bf16.msra.mxu0 %v1019
        %1120 = vmatprep.subr.bf16.mxu0 0
        %1121 = vmatpush1.bf16.msra.mxu0 %v1020
        %1122 = vmatprep.subr.bf16.mxu0 0
        %1123 = vmatpush1.bf16.msra.mxu0 %v1021
        %1124 = vmatprep.subr.bf16.mxu0 0
        %1125 = vmatpush1.bf16.msra.mxu0 %v1022
        %1126 = vmatprep.subr.bf16.mxu0 0
        %1127 = vmatpush1.bf16.msra.mxu0 %v1023
        %1128 = vmatprep.subr.bf16.mxu0 0
        %1129 = vmatpush1.bf16.msra.mxu0 %v1024
        %1130 = vmatprep.subr.bf16.mxu0 0
        %1131 = vmatpush1.bf16.msra.mxu0 0
        %1132 = vmatprep.subr.bf16.mxu0 0
        %1133 = vmatpush1.bf16.msra.mxu0 0
        %1134 = vmatprep.subr.bf16.mxu0 0
        %1135 = vmatpush1.bf16.msra.mxu0 0
        %1136 = vmatprep.subr.bf16.mxu0 0
        %1137 = vmatpush1.bf16.msra.mxu0 0
        %1138 = vmatprep.subr.bf16.mxu0 0
        %1139 = vmatpush1.bf16.msra.mxu0 0
        %1140 = vmatprep.subr.bf16.mxu0 0
        %1141 = vmatpush1.bf16.msra.mxu0 0
        %1142 = vmatprep.subr.bf16.mxu0 0
        %1143 = vmatpush1.bf16.msra.mxu0 0
        %1144 = vmatprep.subr.bf16.mxu0 0
        %1145 = vmatpush1.bf16.msra.mxu0 0
        %1146 = vmatprep.mubr.bf16.mxu0 0
        %1147 = vmatmul.mubr.bf16.gmra.mrb[0].mxu0 %v840
        %v1148 = vpop.f32.mrb[0].mxu0
        %v1149 = vadd.f32 %v1084, %v1148
        %v1150 = vpop.f32.mrb[0].mxu0
        %v1151 = vpop.f32.mrb[0].mxu0
        %v1152 = vadd.f32 %v1087, %v1151
        %v1153 = vpop.f32.mrb[0].mxu0
        %1154 = vmatprep.mubr.bf16.mxu0 0
        %1155 = vmatmul.mubr.bf16.gmra.mrb[0].mxu0 %v843
        %v1156 = vpop.f32.mrb[0].mxu0
        %v1157 = vadd.f32 %v1092, %v1156
        %v1158 = vpop.f32.mrb[0].mxu0
        %v1159 = vpop.f32.mrb[0].mxu0
        %v1160 = vadd.f32 %v1095, %v1159
        %v1161 = vpop.f32.mrb[0].mxu0
        %1162 = vmatprep.mubr.bf16.mxu0 0
        %1163 = vmatmul.mubr.bf16.gmra.mrb[0].mxu0 %v846
        %v1164 = vpop.f32.mrb[0].mxu0
        %v1165 = vadd.f32 %v1100, %v1164
        %v1166 = vpop.f32.mrb[0].mxu0
        %v1167 = vpop.f32.mrb[0].mxu0
        %v1168 = vadd.f32 %v1103, %v1167
        %v1169 = vpop.f32.mrb[0].mxu0
        %1170 = vmatprep.mubr.bf16.mxu0 0
        %1171 = vmatmul.mubr.bf16.gmra.mrb[0].mxu0 %v849
        %v1172 = vpop.f32.mrb[0].mxu0
        %v1173 = vadd.f32 %v1108, %v1172
        %v1174 = vpop.f32.mrb[0].mxu0
        %v1175 = vpop.f32.mrb[0].mxu0
        %v1176 = vadd.f32 %v1111, %v1175
        %v1177 = vpop.f32.mrb[0].mxu0
        %1178 = vdwg.mxu0
        %1179 = vst [vmem:[%s271] sm:$0xff] %v1149
        %1180 = vst [vmem:[%s271 + $0x8] sm:$0xff] %v1152
        %1181 = vst [vmem:[%s271 + $0x10] sm:$0xff] %v1157
        %1182 = vst [vmem:[%s271 + $0x18] sm:$0xff] %v1160
        %1183 = vst [vmem:[%s271 + $0x20] sm:$0xff] %v1165
        %1184 = vst [vmem:[%s271 + $0x28] sm:$0xff] %v1168
        %1185 = vst [vmem:[%s271 + $0x30] sm:$0xff] %v1173
        %1186 = vst [vmem:[%s271 + $0x38] sm:$0xff] %v1176
        %s1187 = sand.u32 %s141, 1
        %s1188 = scalar_lea.sflag [#allocation4], %s1187
        %s1189 = sand.u32 %s141, 1
        %s1190 = smul.addr %s1189, 64
        %s1191 = scalar_lea.vmem [#allocation8], %s1190
        // Predicated region
        $region53: #{tpu_custom_call.1} parent=39 // pred_check
          %p1192 = pneg %p151
        $region54: #{tpu_custom_call.1} parent=39 // pred_check_branch
          %1194 = sbr.rel (%p1192) target = $region56
        $region55: #{tpu_custom_call.1} parent=39 // pred_region
          %s1195 = smul.u32 8, %s23
          %s1197 = ssub.s32 1024, 1024
          %1198 = vsyncadd %s1188, %s1197
          %s1199 = smul.addr %s1195, 128
          %s1200 = scalar_lea.hbm %s5, %s1199
          %s1201 = sshll.u32 %s1191, 4
          %s1202 = int_to_ptr.vmem [resolvable:$true] %s1201
          %1207 = dma.vmem_to_hbm [thread:$0]  %s1202, 1024, %s1200, %s1188, 128, 128, 8
        $region56: #{tpu_custom_call.1} parent=39 // pred_fallthru
          _
      $region40: #{tpu_custom_call.1} parent=5 // pred_fallthru
        _
      %p1208 = scmp.le.s32.totalorder 2, %s18
      // Predicated region
      $region57: #{tpu_custom_call.1} parent=5 // pred_check
        %p1209 = pneg %p1208
      $region58: #{tpu_custom_call.1} parent=5 // pred_check_branch
        %1211 = sbr.rel (%p1209) target = $region60
      $region59: #{tpu_custom_call.1} parent=5 // pred_region
        %s1212 = ssub.s32 %s18, 2
        // Predicated region
        $region61: #{tpu_custom_call.1} parent=59 // pred_check
          %p1213 = pneg %p157
        $region62: #{tpu_custom_call.1} parent=59 // pred_check_branch
          %1215 = sbr.rel (%p1213) target = $region64
        $region63: #{tpu_custom_call.1} parent=59 // pred_region
          %s1216 = sand.u32 %s142, 1
          %s1217 = scalar_lea.sflag [#allocation4], %s1216
          %s1218 = sand.u32 %s142, 1
          %s1219 = smul.addr %s1218, 64
          %s1220 = scalar_lea.vmem [#allocation8], %s1219
          %1221 = dma.done %s1217, 1024
        $region64: #{tpu_custom_call.1} parent=59 // pred_fallthru
          _
      $region60: #{tpu_custom_call.1} parent=5 // pred_fallthru
        _
    $region6: #{tpu_custom_call.1} parent=1 // loop_footer
      %s22 = sadd.s32 1, %s18
    $region7: #{tpu_custom_call.1} parent=1 // loop_footer_branch
      %17 = sbr.rel target = $region3
    $region8: #{tpu_custom_call.1} parent=1 // loop_exit
      _
    %1222 = vsyncpa [#allocation3], 1
    %s1223 = scalar_lea.sflag [#allocation3], 1
    %1224 = vsyncpa %s1223, 1
    %1225 = vsyncpa [#allocation6], 1
    %1226 = vsyncpa [#allocation4], 1
    %s1227 = scalar_lea.sflag [#allocation4], 1
    %1228 = vsyncpa %s1227, 1

</llo_original>
